<compile_context>
chip_gen: v6e
topology: v6e:2x2x1
jax: 0.10.0
libtpu: 0.0.40
codegen_flags: <defaults>
</compile_context>

<pallas_src>
import functools

import jax
import jax.numpy as jnp
from jax import lax
from jax.experimental import pallas as pl
from jax.experimental.pallas import tpu as pltpu

LANE = 128                                  # TPU lane width (f32)
SUBLANE = 8                                 # f32 sublanes per vreg
_W_MAX = 2048                               # lane width of the flattened planes
_BLOCK_BYTES_PER_PLANE = 2 * 1024 * 1024    # ~2 MiB per plane per grid block
_VMEM_LIMIT_BYTES = 40 * 1024 * 1024        # explicit scoped-VMEM limit (all gens)


def _cdiv(a, b):
    return -(-a // b)


def _plane_layout(n, block_bytes):
    """Choose (rows, w, block_rows) for laying n f32 points on a 2-D plane.

    Widest lane count first; a single full-extent block unless one block would
    exceed `block_bytes` per plane, in which case rows are padded so equal,
    sublane-aligned blocks tile the plane exactly.
    """
    if n <= _W_MAX:
        w = max(LANE, _cdiv(n, LANE) * LANE)
        return 1, w, 1
    w = _W_MAX
    rows = _cdiv(n, w)
    bm_budget = max(SUBLANE, (block_bytes // (w * 4)) // SUBLANE * SUBLANE)
    if rows <= bm_budget:
        return rows, w, rows                      # one full-extent block
    g = _cdiv(rows, bm_budget)                    # number of grid steps
    bm = _cdiv(_cdiv(rows, g), SUBLANE) * SUBLANE # equal, 8-aligned blocks
    return g * bm, w, bm


def _pde_expr_kernel(coef_ref, f_ref, x_ref, o_ref):
    """out = c1 * u_xx + c2 * (x**2 * u), complex math on split re/im planes.

    coef_ref : SMEM f32[4]        = [Re(c1), Im(c1), Re(c2), Im(c2)]
    f_ref    : VMEM f32[4, bm, W] = [Re(u), Im(u), Re(u_xx), Im(u_xx)]
    x_ref    : VMEM f32[bm, W]
    o_ref    : VMEM f32[2, bm, W] = [Re(out), Im(out)]
    """
    c1r = coef_ref[0]
    c1i = coef_ref[1]
    c2r = coef_ref[2]
    c2i = coef_ref[3]

    x = x_ref[...]
    x2 = x * x                       # x**2 (real)
    ar = c2r * x2                    # Re(c2) * x^2  (shared by both outputs)
    ai = c2i * x2                    # Im(c2) * x^2

    ur = f_ref[0]
    ui = f_ref[1]
    dr = f_ref[2]                    # Re(u_xx)
    di = f_ref[3]                    # Im(u_xx)

    # complex MAC: (a+bi)(c+di) = (ac - bd) + (ad + bc) i
    o_ref[0] = c1r * dr - c1i * di + ar * ur - ai * ui
    o_ref[1] = c1r * di + c1i * dr + ar * ui + ai * ur


@functools.partial(jax.jit, static_argnames=("block_bytes",))
def _forward_impl(coefs, u, u_xx, x, *, block_bytes=_BLOCK_BYTES_PER_PLANE):
    n = u.shape[0]
    rows, w, bm = _plane_layout(n, block_bytes)
    total = rows * w
    pad = total - n

    u = u.reshape(n).astype(jnp.complex64)
    u_xx = u_xx.reshape(n).astype(jnp.complex64)
    xf = x.reshape(n).astype(jnp.float32)

    def plane(v):
        if pad:
            v = jnp.pad(v, (0, pad))
        return v.reshape(rows, w)

    fields = jnp.stack(
        [plane(jnp.real(u)), plane(jnp.imag(u)),
         plane(jnp.real(u_xx)), plane(jnp.imag(u_xx))], axis=0)
    xplane = plane(xf)

    grid = (rows // bm,)
    out = pl.pallas_call(
        _pde_expr_kernel,
        out_shape=jax.ShapeDtypeStruct((2, rows, w), jnp.float32),
        grid_spec=pl.GridSpec(
            grid=grid,
            in_specs=[
                pl.BlockSpec(memory_space=pltpu.MemorySpace.SMEM),  # 4 coeff scalars
                pl.BlockSpec((4, bm, w), lambda i: (0, i, 0)),      # u / u_xx planes
                pl.BlockSpec((bm, w), lambda i: (i, 0)),            # x plane
            ],
            out_specs=pl.BlockSpec((2, bm, w), lambda i: (0, i, 0)),
        ),
        compiler_params=pltpu.CompilerParams(
            dimension_semantics=("parallel",),
            vmem_limit_bytes=_VMEM_LIMIT_BYTES),
        cost_estimate=pl.CostEstimate(
            flops=17 * total, transcendentals=0, bytes_accessed=28 * total),
    )(coefs, fields, xplane)

    out_re = out[0].reshape(total)[:n]
    out_im = out[1].reshape(total)[:n]
    # sympytorch stacks the (single) expression along a new trailing axis
    return lax.complex(out_re, out_im).reshape(n, 1, 1)


class PDEExpression:
    """JAX/Pallas port of the PyTorch PDEExpression module (forward only)."""

    def __init__(self, terms, values):
        self.terms = list(terms)
        self.values = [complex(v) for v in values]
        self.diff_dict = dict(zip(self.terms, self.values))
        self.string_expression = '+'.join(
            str(v) + '*' + str(k) for k, v in self.diff_dict.items())
        # TODO(synk): general sympy expression -> kernel codegen (sympytorch
        # SymPyModule) is not reproduced; only the fixed QHO residual
        # c1*u_xx + c2*(x**2*u) is lowered to the Pallas kernel.
        assert self.terms == ['u_xx', 'x**2*u'], "kernel built for the QHO terms"
        c1, c2 = self.values
        # Coefficients are runtime data (SMEM operand), not baked constants,
        # so learned-coefficient updates do not force a recompile.
        self._coefs = jnp.array([c1.real, c1.imag, c2.real, c2.imag], jnp.float32)
        self._block_bytes = _BLOCK_BYTES_PER_PLANE

    def get_coeff(self, t):
        return self.diff_dict[t]

    def __call__(self, e):
        """e: dict with complex 'u', 'u_xx' of shape (N, 1) and real 'x' (N, 1).

        Returns complex64 of shape (N, 1, 1).
        """
        u = jnp.asarray(e['u'])
        u_xx = jnp.asarray(e['u_xx'])
        x = jnp.asarray(e['x'])
        return _forward_impl(self._coefs, u, u_xx, x,
                             block_bytes=self._block_bytes)


if __name__ == "__main__":
    # i*u_t = -0.5*u_xx + 0.5*x^2*u  =>  residual terms with learned coeffs
    terms = ['u_xx', 'x**2*u']
    values = [0.5j, -0.5j]
    pde = PDEExpression(terms, values)

    def make_inputs(n, key):
        k1, k2, k3, k4, k5 = jax.random.split(key, 5)
        u = (jax.random.normal(k1, (n, 1), jnp.float32)
             + 1j * jax.random.normal(k2, (n, 1), jnp.float32)).astype(jnp.complex64)
        u_xx = (jax.random.normal(k3, (n, 1), jnp.float32)
                + 1j * jax.random.normal(k4, (n, 1), jnp.float32)).astype(jnp.complex64)
        x = jax.random.uniform(k5, (n, 1), jnp.float32, minval=-4.0, maxval=4.0)
        return u, u_xx, x

    def reference(u, u_xx, x):
        return (0.5j * u_xx + (-0.5j) * (x.astype(jnp.complex64) ** 2) * u)[..., None]

    key = jax.random.PRNGKey(0)
    k_a, k_b, k_c = jax.random.split(key, 3)

    # 1) exact lane-dense layout, single full-extent block (grid=(1,))
    u, u_xx, x = make_inputs(2048, k_a)
    out = jax.block_until_ready(pde({'u': u, 'u_xx': u_xx, 'x': x}))
    assert out.shape == (2048, 1, 1) and out.dtype == jnp.complex64
    assert jnp.allclose(out, reference(u, u_xx, x), atol=1e-5, rtol=1e-5)

    # 2) N not a multiple of the lane width -> zero-padded single block
    u, u_xx, x = make_inputs(1000, k_b)
    out = jax.block_until_ready(pde({'u': u, 'u_xx': u_xx, 'x': x}))
    assert out.shape == (1000, 1, 1)
    assert jnp.allclose(out, reference(u, u_xx, x), atol=1e-5, rtol=1e-5)

    # 3) force the multi-block pipelined path with a tiny per-plane budget
    u, u_xx, x = make_inputs(65536, k_c)
    out = jax.block_until_ready(
        _forward_impl(pde._coefs, u, u_xx, x, block_bytes=32 * 1024))
    assert out.shape == (65536, 1, 1)
    assert jnp.allclose(out, reference(u, u_xx, x), atol=1e-5, rtol=1e-5)

    print("KERNEL_OK")
</pallas_src>

<mosaic_0001>
module attributes {stable_mosaic.version = 11 : i64} {
  func.func @_pde_expr_kernel(%arg0: i32, %arg1: memref<4xf32, #tpu.memory_space<smem>>, %arg2: memref<4x1x2048xf32, #tpu.memory_space<vmem>>, %arg3: memref<1x2048xf32, #tpu.memory_space<vmem>>, %arg4: memref<2x1x2048xf32, #tpu.memory_space<vmem>>) attributes {dimension_semantics = [#tpu.dimension_semantics<parallel>], iteration_bounds = array<i64: 1>, scalar_prefetch = 0 : i64, scratch_operands = 0 : i64, tpu.core_type = #tpu.core_type<tc>, window_params = [{transform_indices = @transform_0, window_bounds = array<i64: 4>}, {transform_indices = @transform_1, window_bounds = array<i64: 4, 1, 2048>}, {transform_indices = @transform_2, window_bounds = array<i64: 1, 2048>}, {transform_indices = @transform_3, window_bounds = array<i64: 2, 1, 2048>}]} {
    %c0 = arith.constant 0 : index
    %0 = memref.load %arg1[%c0] : memref<4xf32, #tpu.memory_space<smem>>
    %c1 = arith.constant 1 : index
    %1 = memref.load %arg1[%c1] : memref<4xf32, #tpu.memory_space<smem>>
    %c2 = arith.constant 2 : index
    %2 = memref.load %arg1[%c2] : memref<4xf32, #tpu.memory_space<smem>>
    %c3 = arith.constant 3 : index
    %3 = memref.load %arg1[%c3] : memref<4xf32, #tpu.memory_space<smem>>
    %c0_0 = arith.constant 0 : index
    %c0_1 = arith.constant 0 : index
    %4 = vector.load %arg3[%c0_0, %c0_1] : memref<1x2048xf32, #tpu.memory_space<vmem>>, vector<1x2048xf32>
    %5 = arith.mulf %4, %4 : vector<1x2048xf32>
    %6 = vector.broadcast %2 : f32 to vector<1x2048xf32>
    %7 = arith.mulf %6, %5 : vector<1x2048xf32>
    %8 = vector.broadcast %3 : f32 to vector<1x2048xf32>
    %9 = arith.mulf %8, %5 : vector<1x2048xf32>
    %c0_2 = arith.constant 0 : index
    %c0_3 = arith.constant 0 : index
    %c0_4 = arith.constant 0 : index
    %10 = vector.load %arg2[%c0_2, %c0_3, %c0_4] : memref<4x1x2048xf32, #tpu.memory_space<vmem>>, vector<1x1x2048xf32>
    %11 = vector.shape_cast %10 : vector<1x1x2048xf32> to vector<1x2048xf32>
    %c1_5 = arith.constant 1 : index
    %c0_6 = arith.constant 0 : index
    %c0_7 = arith.constant 0 : index
    %12 = vector.load %arg2[%c1_5, %c0_6, %c0_7] : memref<4x1x2048xf32, #tpu.memory_space<vmem>>, vector<1x1x2048xf32>
    %13 = vector.shape_cast %12 : vector<1x1x2048xf32> to vector<1x2048xf32>
    %c2_8 = arith.constant 2 : index
    %c0_9 = arith.constant 0 : index
    %c0_10 = arith.constant 0 : index
    %14 = vector.load %arg2[%c2_8, %c0_9, %c0_10] : memref<4x1x2048xf32, #tpu.memory_space<vmem>>, vector<1x1x2048xf32>
    %15 = vector.shape_cast %14 : vector<1x1x2048xf32> to vector<1x2048xf32>
    %c3_11 = arith.constant 3 : index
    %c0_12 = arith.constant 0 : index
    %c0_13 = arith.constant 0 : index
    %16 = vector.load %arg2[%c3_11, %c0_12, %c0_13] : memref<4x1x2048xf32, #tpu.memory_space<vmem>>, vector<1x1x2048xf32>
    %17 = vector.shape_cast %16 : vector<1x1x2048xf32> to vector<1x2048xf32>
    %18 = vector.broadcast %0 : f32 to vector<1x2048xf32>
    %19 = arith.mulf %18, %15 : vector<1x2048xf32>
    %20 = vector.broadcast %1 : f32 to vector<1x2048xf32>
    %21 = arith.mulf %20, %17 : vector<1x2048xf32>
    %22 = arith.subf %19, %21 : vector<1x2048xf32>
    %23 = arith.mulf %7, %11 : vector<1x2048xf32>
    %24 = arith.addf %22, %23 : vector<1x2048xf32>
    %25 = arith.mulf %9, %13 : vector<1x2048xf32>
    %26 = arith.subf %24, %25 : vector<1x2048xf32>
    %c0_14 = arith.constant 0 : index
    %c0_15 = arith.constant 0 : index
    %c0_16 = arith.constant 0 : index
    %27 = vector.load %arg4[%c0_14, %c0_15, %c0_16] : memref<2x1x2048xf32, #tpu.memory_space<vmem>>, vector<1x1x2048xf32>
    %28 = vector.shape_cast %27 : vector<1x1x2048xf32> to vector<1x2048xf32>
    %29 = vector.shape_cast %26 : vector<1x2048xf32> to vector<1x1x2048xf32>
    tpu.vector_store %arg4[%c0_14, %c0_15, %c0_16], %29 {strides = array<i32>} : memref<2x1x2048xf32, #tpu.memory_space<vmem>>, vector<1x1x2048xf32>,
    %30 = vector.broadcast %0 : f32 to vector<1x2048xf32>
    %31 = arith.mulf %30, %17 : vector<1x2048xf32>
    %32 = vector.broadcast %1 : f32 to vector<1x2048xf32>
    %33 = arith.mulf %32, %15 : vector<1x2048xf32>
    %34 = arith.addf %31, %33 : vector<1x2048xf32>
    %35 = arith.mulf %7, %13 : vector<1x2048xf32>
    %36 = arith.addf %34, %35 : vector<1x2048xf32>
    %37 = arith.mulf %9, %11 : vector<1x2048xf32>
    %38 = arith.addf %36, %37 : vector<1x2048xf32>
    %c1_17 = arith.constant 1 : index
    %c0_18 = arith.constant 0 : index
    %c0_19 = arith.constant 0 : index
    %39 = vector.load %arg4[%c1_17, %c0_18, %c0_19] : memref<2x1x2048xf32, #tpu.memory_space<vmem>>, vector<1x1x2048xf32>
    %40 = vector.shape_cast %39 : vector<1x1x2048xf32> to vector<1x2048xf32>
    %41 = vector.shape_cast %38 : vector<1x2048xf32> to vector<1x1x2048xf32>
    tpu.vector_store %arg4[%c1_17, %c0_18, %c0_19], %41 {strides = array<i32>} : memref<2x1x2048xf32, #tpu.memory_space<vmem>>, vector<1x1x2048xf32>,
    return
  }
  func.func @transform_0(%arg0: i32) -> i32 {
    %c0_i32 = arith.constant 0 : i32
    %c0_i32_0 = arith.constant 0 : i32
    return %c0_i32 : i32
  }
  func.func @transform_1(%arg0: i32) -> (i32, i32, i32) {
    %c0_i32 = arith.constant 0 : i32
    %c0_i32_0 = arith.constant 0 : i32
    %c0_i32_1 = arith.constant 0 : i32
    return %c0_i32, %arg0, %c0_i32_0 : i32, i32, i32
  }
  func.func @transform_2(%arg0: i32) -> (i32, i32) {
    %c0_i32 = arith.constant 0 : i32
    %c0_i32_0 = arith.constant 0 : i32
    return %arg0, %c0_i32 : i32, i32
  }
  func.func @transform_3(%arg0: i32) -> (i32, i32, i32) {
    %c0_i32 = arith.constant 0 : i32
    %c0_i32_0 = arith.constant 0 : i32
    %c0_i32_1 = arith.constant 0 : i32
    return %c0_i32, %arg0, %c0_i32_0 : i32, i32, i32
  }
}

</mosaic_0001>

<llo_original>
// kernel: custom-call.1
$region0: #{custom-call.1}
  %s0 = inlined_call_operand.hbm [shape: c64[2048,1], index: 0, kind: input, shape index: {}]
  %s1 = inlined_call_operand.vmem [shape: f32[2048,1], index: 1, kind: output, shape index: {}]
  %s2 = scalar_lea.hbm %s0, 256
  $region1: #{custom-call.1} parent=0
    #allocation0 [shape = 's32[1]{0}', space=sflag, size = 0x4, scoped, tag = 'scoped memory for custom-call.1']
    %3 = vsyncpa [#allocation0], 0
    %s4 = sshll.u32 %s1, 4
    %s5 = int_to_ptr.vmem [resolvable:$true] %s4
    %7 = dma.hbm_to_vmem [thread:$0]  %s2, 256, %s5, [#allocation0]
    %8 = dma.done [#allocation0], 256
    %9 = vsyncpa [#allocation0], 1

// kernel: custom-call
$region0: #{custom-call}
  %s0 = inlined_call_operand.hbm [shape: c64[2048,1], index: 0, kind: input, shape index: {}]
  %s1 = inlined_call_operand.vmem [shape: f32[2048,1], index: 1, kind: output, shape index: {}]
  $region1: #{custom-call} parent=0
    #allocation0 [shape = 's32[1]{0}', space=sflag, size = 0x4, scoped, tag = 'scoped memory for custom-call']
    %2 = vsyncpa [#allocation0], 0
    %s3 = sshll.u32 %s1, 4
    %s4 = int_to_ptr.vmem [resolvable:$true] %s3
    %6 = dma.hbm_to_vmem [thread:$0]  %s0, 256, %s4, [#allocation0]
    %7 = dma.done [#allocation0], 256
    %8 = vsyncpa [#allocation0], 1

// kernel: custom-call.4
$region0: #{custom-call.4}
  %s0 = inlined_call_operand.vmem [shape: f32[2048,1,1], index: 0, kind: input, shape index: {}]
  %s1 = inlined_call_operand.vmem [shape: f32[2048,1,1], index: 1, kind: input, shape index: {}]
  %s2 = inlined_call_operand.hbm [shape: c64[2048,1,1], index: 2, kind: output, shape index: {}]
  %s3 = scalar_lea.hbm %s2, 256
  $region1: #{custom-call.4} parent=0
    #allocation0 [shape = 's32[1]{0}', space=sflag, size = 0x4, scoped, tag = 'scoped memory for custom-call.4']
    %4 = vsyncpa [#allocation0], 0
    %s5 = sshll.u32 %s0, 4
    %s6 = int_to_ptr.vmem [resolvable:$true] %s5
    %8 = dma.vmem_to_hbm [thread:$0]  %s6, 256, %s2, [#allocation0]
    %9 = dma.done [#allocation0], 256
    %10 = vsyncpa [#allocation0], 1
  $region2: #{custom-call.4} parent=0
    #allocation1 [shape = 's32[1]{0}', space=sflag, size = 0x4, scoped, tag = 'scoped memory for custom-call.4']
    %11 = vsyncpa [#allocation1], 0
    %s12 = sshll.u32 %s1, 4
    %s13 = int_to_ptr.vmem [resolvable:$true] %s12
    %15 = dma.vmem_to_hbm [thread:$0]  %s13, 256, %s3, [#allocation1]
    %16 = dma.done [#allocation1], 256
    %17 = vsyncpa [#allocation1], 1

// kernel: _forward_impl.1
$region0: #{_forward_impl.1}
  #allocation0 [shape = 'u32[]', space=smem, size = 0x4, offset = 0x4, fixed_abs, tag = 'smem constant byte address 0x4 - core index']
  #allocation1 [shape = 'u32[144,128]{1,0:T(1,128)}', space=vmem, size = 0x12000, scoped, tag = 'internal scratch']
  %s0 = inlined_call_operand.vmem [shape: f32[4], index: 0, kind: input, shape index: {}]
  %s1 = inlined_call_operand.vmem [shape: f32[4,1,2048], index: 1, kind: input, shape index: {}]
  %s2 = inlined_call_operand.vmem [shape: f32[1,2048], index: 2, kind: input, shape index: {}]
  %s3 = inlined_call_operand.vmem [shape: f32[2,1,2048], index: 3, kind: output, shape index: {}]
  %s4 = sld [smem:[#allocation0]]
  $region26: #{_forward_impl.1} parent=0
    _
  %s6 = ssub.s32 1, %s4
  %s7 = scalar_select 0, %s6, %s4
  $region1: #{_forward_impl.1} parent=0
    #allocation2 [shape = 'u8[512]{0}', space=smem, size = 0x200, scoped, tag = 'input window, operand 0, single buffered']
    #allocation3 [shape = 's32[1]{0}', space=sflag, size = 0x4, scoped, tag = 'scoped memory for _forward_impl.1']
    %8 = vsyncpa [#allocation3], 0
    // Predicated region
    $region2: #{_forward_impl.1} parent=1 // pred_check
      _
    $region3: #{_forward_impl.1} parent=1 // pred_check_branch
      %10 = sbr.rel (0) target = $region5
    $region4: #{_forward_impl.1} parent=1 // pred_region
      %s12 = ssub.s32 16, 16
      %13 = vsyncadd [#allocation3], %s12
      %s15 = sshll.u32 %s0, 4
      %s16 = int_to_ptr.vmem [resolvable:$true] %s15
      %18 = dma.vmem_to_smem %s16, 16, [#allocation2], [#allocation3]
    $region5: #{_forward_impl.1} parent=1 // pred_fallthru
      _
    // Predicated region
    $region6: #{_forward_impl.1} parent=1 // pred_check
      _
    $region7: #{_forward_impl.1} parent=1 // pred_check_branch
      %20 = sbr.rel (0) target = $region9
    $region8: #{_forward_impl.1} parent=1 // pred_region
      _
    $region9: #{_forward_impl.1} parent=1 // pred_fallthru
      _
    // Predicated region
    $region10: #{_forward_impl.1} parent=1 // pred_check
      _
    $region11: #{_forward_impl.1} parent=1 // pred_check_branch
      %22 = sbr.rel (0) target = $region13
    $region12: #{_forward_impl.1} parent=1 // pred_region
      _
    $region13: #{_forward_impl.1} parent=1 // pred_fallthru
      _
    // Predicated region
    $region14: #{_forward_impl.1} parent=1 // pred_check
      _
    $region15: #{_forward_impl.1} parent=1 // pred_check_branch
      %24 = sbr.rel (0) target = $region17
    $region16: #{_forward_impl.1} parent=1 // pred_region
      %25 = dma.done [#allocation3], 16
    $region17: #{_forward_impl.1} parent=1 // pred_fallthru
      _
    %26 = sfence
    %s27 = sld [smem:[#allocation2]]
    %s28 = sld [smem:[#allocation2 + $0x1]]
    %s29 = sld [smem:[#allocation2 + $0x2]]
    %s30 = sld [smem:[#allocation2 + $0x3]]
    %v31 = vld [vmem:[%s2] sm:$0xff]
    %v32 = vld [vmem:[%s2 + $0x8] sm:$0xff]
    %v33 = vmul.f32 %v31, %v31
    %v34 = vmul.f32 %v32, %v32
    %v35 = vstv %s29
    %v36 = vmul.f32 %v35, %v33
    %v37 = vmul.f32 %v35, %v34
    %v38 = vstv %s30
    %v39 = vmul.f32 %v38, %v33
    %v40 = vmul.f32 %v38, %v34
    %v41 = vld [vmem:[%s1] sm:$0xff]
    %v42 = vld [vmem:[%s1 + $0x8] sm:$0xff]
    %s43 = scalar_lea.vmem %s1, 16
    %v44 = vld [vmem:[%s43] sm:$0xff]
    %v45 = vld [vmem:[%s43 + $0x8] sm:$0xff]
    %s46 = scalar_lea.vmem %s1, 32
    %v47 = vld [vmem:[%s46] sm:$0xff]
    %v48 = vld [vmem:[%s46 + $0x8] sm:$0xff]
    %s49 = scalar_lea.vmem %s1, 48
    %v50 = vld [vmem:[%s49] sm:$0xff]
    %v51 = vld [vmem:[%s49 + $0x8] sm:$0xff]
    %v52 = vstv %s27
    %v53 = vmul.f32 %v52, %v47
    %v54 = vmul.f32 %v52, %v48
    %v55 = vstv %s28
    %v56 = vmul.f32 %v55, %v50
    %v57 = vmul.f32 %v55, %v51
    %v58 = vsub.f32 %v53, %v56
    %v59 = vsub.f32 %v54, %v57
    %v60 = vmul.f32 %v36, %v41
    %v61 = vmul.f32 %v37, %v42
    %v62 = vadd.f32 %v58, %v60
    %v63 = vadd.f32 %v59, %v61
    %v64 = vmul.f32 %v39, %v44
    %v65 = vmul.f32 %v40, %v45
    %v66 = vsub.f32 %v62, %v64
    %v67 = vsub.f32 %v63, %v65
    %68 = vst [vmem:[%s3] sm:$0xff] %v66
    %69 = vst [vmem:[%s3 + $0x8] sm:$0xff] %v67
    %v70 = vmul.f32 %v52, %v50
    %v71 = vmul.f32 %v52, %v51
    %v72 = vmul.f32 %v55, %v47
    %v73 = vmul.f32 %v55, %v48
    %v74 = vadd.f32 %v70, %v72
    %v75 = vadd.f32 %v71, %v73
    %v76 = vmul.f32 %v36, %v44
    %v77 = vmul.f32 %v37, %v45
    %v78 = vadd.f32 %v74, %v76
    %v79 = vadd.f32 %v75, %v77
    %v80 = vmul.f32 %v39, %v41
    %v81 = vmul.f32 %v40, %v42
    %v82 = vadd.f32 %v78, %v80
    %v83 = vadd.f32 %v79, %v81
    %s84 = scalar_lea.vmem %s3, 16
    %85 = vst [vmem:[%s84] sm:$0xff] %v82
    %86 = vst [vmem:[%s84 + $0x8] sm:$0xff] %v83
    // Predicated region
    $region18: #{_forward_impl.1} parent=1 // pred_check
      _
    $region19: #{_forward_impl.1} parent=1 // pred_check_branch
      %88 = sbr.rel (0) target = $region21
    $region20: #{_forward_impl.1} parent=1 // pred_region
      _
    $region21: #{_forward_impl.1} parent=1 // pred_fallthru
      _
    // Predicated region
    $region22: #{_forward_impl.1} parent=1 // pred_check
      _
    $region23: #{_forward_impl.1} parent=1 // pred_check_branch
      %90 = sbr.rel (0) target = $region25
    $region24: #{_forward_impl.1} parent=1 // pred_region
      _
    $region25: #{_forward_impl.1} parent=1 // pred_fallthru
      _
    %91 = vsyncpa [#allocation3], 1

</llo_original>
